<compile_context>
chip_gen: v7x
topology: tpu7x:2x2x1
jax: 0.10.0
libtpu: 0.0.40
codegen_flags: <defaults>
</compile_context>

<pallas_src>
import functools

import jax
import jax.numpy as jnp
from jax import lax
from jax.experimental import pallas as pl
from jax.experimental.pallas import tpu as pltpu


def _cbn_kernel(x_ref, p_ref, o_ref,
                s_re_ref, q_re_ref, s_im_ref, q_im_ref,
                *, eps, inv_count):
    # x_ref/o_ref: (n_blk, c_blk, l_blk)   lanes interleave [re, im, re, im...]
    # p_ref:       (c_blk, 4)              columns = [gamma_re, beta_re, gamma_im, beta_im]
    # scratches:   (1, c_blk, 1) f32       per-channel sum / sumsq accumulators
    phase = pl.program_id(1)
    ni = pl.program_id(2)
    li = pl.program_id(3)

    n_blk, c_blk, l_blk = x_ref.shape
    lane = lax.broadcasted_iota(jnp.int32, (1, 1, l_blk), 2)
    is_re = (lane % 2) == 0  # even lanes carry the real component

    # Reset accumulators at the start of each channel-block sweep.
    @pl.when((phase == 0) & (ni == 0) & (li == 0))
    def _init():
        zero = jnp.zeros((1, c_blk, 1), jnp.float32)
        s_re_ref[...] = zero
        q_re_ref[...] = zero
        s_im_ref[...] = zero
        q_im_ref[...] = zero

    # Phase 0: single-pass sum and sum-of-squares accumulation (f32).
    @pl.when(phase == 0)
    def _accumulate():
        xf = x_ref[...].astype(jnp.float32)
        x_re = jnp.where(is_re, xf, 0.0)
        x_im = jnp.where(is_re, 0.0, xf)
        s_re_ref[...] += jnp.sum(x_re, axis=(0, 2), keepdims=True)
        s_im_ref[...] += jnp.sum(x_im, axis=(0, 2), keepdims=True)
        q_re_ref[...] += jnp.sum(x_re * x_re, axis=(0, 2), keepdims=True)
        q_im_ref[...] += jnp.sum(x_im * x_im, axis=(0, 2), keepdims=True)

    # Phase 1: fold normalization into one scale/shift pass.
    @pl.when(phase == 1)
    def _normalize():
        params = p_ref[...].astype(jnp.float32)        # (c_blk, 4)
        g_re = params[:, 0:1][None]                    # (1, c_blk, 1)
        b_re = params[:, 1:2][None]
        g_im = params[:, 2:3][None]
        b_im = params[:, 3:4][None]

        mean_re = s_re_ref[...] * inv_count
        mean_im = s_im_ref[...] * inv_count
        var_re = jnp.maximum(q_re_ref[...] * inv_count - mean_re * mean_re, 0.0)
        var_im = jnp.maximum(q_im_ref[...] * inv_count - mean_im * mean_im, 0.0)

        scale_re = lax.rsqrt(var_re + eps) * g_re
        scale_im = lax.rsqrt(var_im + eps) * g_im
        shift_re = b_re - mean_re * scale_re
        shift_im = b_im - mean_im * scale_im

        scale = jnp.where(is_re, scale_re, scale_im)   # (1, c_blk, l_blk)
        shift = jnp.where(is_re, shift_re, shift_im)

        xf = x_ref[...].astype(jnp.float32)
        o_ref[...] = (xf * scale + shift).astype(o_ref.dtype)


def complex_batch_norm_2d(x, gamma_re, beta_re, gamma_im, beta_im, eps=1e-5):
    """x: (N, C, H, W, 2); gammas/betas: (C,). Returns (N, C, H, W, 2)."""
    N, C, H, W, two = x.shape
    assert two == 2
    HW2 = H * W * 2
    bytes_per = jnp.dtype(x.dtype).itemsize

    # --- channel (sublane) block: dtype-aware, must divide C or be full C ---
    sub = {4: 8, 2: 16, 1: 32}.get(bytes_per, 8)
    if C % sub == 0:
        c_blk = sub
    elif C % 8 == 0:
        c_blk = 8
    else:
        c_blk = C  # full-extent block is always legal

    # --- lane / batch tiling: cap per-buffer block bytes (~2 MiB) so that
    #     in+out double buffering (~4x) fits every generation's default
    #     scoped VMEM (16/32/32 MiB on v5e/v6e/v7x). ---
    MAX_BLOCK_BYTES = 2 * 1024 * 1024
    if HW2 % 128 == 0:
        units = HW2 // 128
        max_units = max(1, min(units, MAX_BLOCK_BYTES // (bytes_per * c_blk * 128)))
        l_blk = 128
        for cand in range(max_units, 0, -1):
            if units % cand == 0:
                l_blk = cand * 128
                break
    else:
        # TODO(synk): pad + mask instead of a full-extent lane block when
        # H*W*2 is not a multiple of 128 and very large.
        l_blk = HW2

    budget_n = max(1, MAX_BLOCK_BYTES // (bytes_per * c_blk * l_blk))
    n_blk = 1
    for cand in range(min(N, budget_n), 0, -1):
        if N % cand == 0:
            n_blk = cand
            break

    # Native layout: free reshape, no transposes (lanes interleave re/im).
    x3 = x.reshape(N, C, HW2)
    params = jnp.stack(
        [gamma_re, beta_re, gamma_im, beta_im], axis=-1
    ).astype(jnp.float32)  # (C, 4)

    grid = (C // c_blk, 2, N // n_blk, HW2 // l_blk)
    inv_count = 1.0 / float(N * H * W)
    kernel = functools.partial(_cbn_kernel, eps=float(eps), inv_count=inv_count)

    out3 = pl.pallas_call(
        kernel,
        out_shape=jax.ShapeDtypeStruct((N, C, HW2), x.dtype),
        grid_spec=pltpu.PrefetchScalarGridSpec(
            num_scalar_prefetch=0,
            grid=grid,
            in_specs=[
                # x block: re-streamed in both phases.
                pl.BlockSpec((n_blk, c_blk, l_blk),
                             lambda c, p, ni, li: (ni, c, li)),
                # params: block index ignores phase/N/L axes -> stays resident.
                pl.BlockSpec((c_blk, 4),
                             lambda c, p, ni, li: (c, 0)),
            ],
            # During phase 0 the output block index is pinned to (0, c, 0) so
            # no garbage is flushed; phase 1 visits and fully writes every
            # block exactly once.
            out_specs=pl.BlockSpec((n_blk, c_blk, l_blk),
                                   lambda c, p, ni, li: (ni * p, c, li * p)),
            scratch_shapes=[pltpu.VMEM((1, c_blk, 1), jnp.float32)] * 4,
        ),
        compiler_params=pltpu.CompilerParams(
            dimension_semantics=("parallel", "arbitrary", "arbitrary", "arbitrary"),
        ),
    )(x3, params)

    return out3.reshape(N, C, H, W, 2)


def _reference(x, gamma_re, beta_re, gamma_im, beta_im, eps=1e-5):
    def bn(xi, g, b):
        xi = xi.astype(jnp.float32)
        mean = jnp.mean(xi, axis=(0, 2, 3), keepdims=True)
        var = jnp.mean((xi - mean) ** 2, axis=(0, 2, 3), keepdims=True)
        y = (xi - mean) * lax.rsqrt(var + eps)
        return y * g[None, :, None, None] + b[None, :, None, None]

    real = bn(x[..., 0], gamma_re, beta_re)
    imag = bn(x[..., 1], gamma_im, beta_im)
    return jnp.stack((real, imag), axis=-1).astype(x.dtype)


if __name__ == "__main__":
    key = jax.random.PRNGKey(0)
    N, C, H, W = 2, 4, 16, 16
    k1, k2, k3, k4, k5 = jax.random.split(key, 5)

    x = jax.random.normal(k1, (N, C, H, W, 2), dtype=jnp.float32)
    # Deterministic (non-trivial) affine parameters for each BatchNorm2d.
    gamma_re = 1.0 + 0.1 * jax.random.normal(k2, (C,), dtype=jnp.float32)
    beta_re = 0.1 * jax.random.normal(k3, (C,), dtype=jnp.float32)
    gamma_im = 1.0 + 0.1 * jax.random.normal(k4, (C,), dtype=jnp.float32)
    beta_im = 0.1 * jax.random.normal(k5, (C,), dtype=jnp.float32)

    out = complex_batch_norm_2d(x, gamma_re, beta_re, gamma_im, beta_im)
    out = jax.block_until_ready(out)

    ref = _reference(x, gamma_re, beta_re, gamma_im, beta_im)
    assert out.shape == (N, C, H, W, 2)
    assert jnp.allclose(out, ref, atol=2e-5, rtol=2e-5), "mismatch vs reference"

    print("KERNEL_OK")
</pallas_src>

<mosaic_0001>
module attributes {stable_mosaic.version = 11 : i64} {
  func.func @_cbn_kernel(%arg0: i32, %arg1: i32, %arg2: i32, %arg3: i32, %arg4: memref<2x4x512xf32, #tpu.memory_space<vmem>>, %arg5: memref<4x4xf32, #tpu.memory_space<vmem>>, %arg6: memref<2x4x512xf32, #tpu.memory_space<vmem>>, %arg7: memref<1x4x1xf32, #tpu.memory_space<vmem>>, %arg8: memref<1x4x1xf32, #tpu.memory_space<vmem>>, %arg9: memref<1x4x1xf32, #tpu.memory_space<vmem>>, %arg10: memref<1x4x1xf32, #tpu.memory_space<vmem>>) attributes {dimension_semantics = [#tpu.dimension_semantics<parallel>, #tpu.dimension_semantics<arbitrary>, #tpu.dimension_semantics<arbitrary>, #tpu.dimension_semantics<arbitrary>], iteration_bounds = array<i64: 1, 2, 1, 1>, scalar_prefetch = 0 : i64, scratch_operands = 4 : i64, tpu.core_type = #tpu.core_type<tc>, window_params = [{transform_indices = @transform_0, window_bounds = array<i64: 2, 4, 512>}, {transform_indices = @transform_1, window_bounds = array<i64: 4, 4>}, {transform_indices = @transform_2, window_bounds = array<i64: 2, 4, 512>}]} {
    %0 = tpu.iota {dimensions = array<i32: 2>} : vector<1x1x512xi32>
    %c2_i32 = arith.constant 2 : i32
    %c0_i32 = arith.constant 0 : i32
    %1 = arith.cmpi eq, %c2_i32, %c0_i32 : i32
    %c1_i32 = arith.constant 1 : i32
    %2 = arith.select %1, %c1_i32, %c2_i32 : i32
    %3 = vector.broadcast %2 : i32 to vector<1x1x512xi32>
    %4 = arith.remsi %0, %3 : vector<1x1x512xi32>
    %c0_i32_0 = arith.constant 0 : i32
    %5 = vector.broadcast %c0_i32_0 : i32 to vector<1x1x512xi32>
    %6 = arith.cmpi ne, %4, %5 : vector<1x1x512xi32>
    %c0_i32_1 = arith.constant 0 : i32
    %7 = vector.broadcast %c0_i32_1 : i32 to vector<1x1x512xi32>
    %8 = arith.cmpi slt, %4, %7 : vector<1x1x512xi32>
    %c0_i32_2 = arith.constant 0 : i32
    %9 = arith.cmpi slt, %2, %c0_i32_2 : i32
    %10 = vector.broadcast %9 : i1 to vector<1x1x512xi1>
    %11 = vector.broadcast %10 : vector<1x1x512xi1> to vector<1x1x512xi1>
    %12 = arith.xori %8, %11 : vector<1x1x512xi1>
    %13 = arith.andi %12, %6 : vector<1x1x512xi1>
    %14 = vector.broadcast %2 : i32 to vector<1x1x512xi32>
    %15 = arith.addi %4, %14 : vector<1x1x512xi32>
    %16 = arith.select %13, %15, %4 : vector<1x1x512xi1>, vector<1x1x512xi32>
    %c0_i32_3 = arith.constant 0 : i32
    %17 = vector.broadcast %c0_i32_3 : i32 to vector<1x1x512xi32>
    %18 = arith.cmpi eq, %16, %17 : vector<1x1x512xi32>
    %c0_i32_4 = arith.constant 0 : i32
    %19 = arith.cmpi eq, %arg1, %c0_i32_4 : i32
    %c0_i32_5 = arith.constant 0 : i32
    %20 = arith.cmpi eq, %arg2, %c0_i32_5 : i32
    %21 = arith.andi %19, %20 : i1
    %c0_i32_6 = arith.constant 0 : i32
    %22 = arith.cmpi eq, %arg3, %c0_i32_6 : i32
    %23 = arith.andi %21, %22 : i1
    %24 = arith.extui %23 : i1 to i32
    %c0_i32_7 = arith.constant 0 : i32
    %25 = arith.cmpi ne, %24, %c0_i32_7 : i32
    scf.if %25 {
      %cst = arith.constant 0.000000e+00 : f32
      %32 = vector.broadcast %cst : f32 to vector<1x4x1xf32>
      %c0 = arith.constant 0 : index
      %c0_12 = arith.constant 0 : index
      %c0_13 = arith.constant 0 : index
      %33 = vector.load %arg7[%c0, %c0_12, %c0_13] : memref<1x4x1xf32, #tpu.memory_space<vmem>>, vector<1x4x1xf32>
      tpu.vector_store %arg7[%c0, %c0_12, %c0_13], %32 {strides = array<i32>} : memref<1x4x1xf32, #tpu.memory_space<vmem>>, vector<1x4x1xf32>,
      %c0_14 = arith.constant 0 : index
      %c0_15 = arith.constant 0 : index
      %c0_16 = arith.constant 0 : index
      %34 = vector.load %arg8[%c0_14, %c0_15, %c0_16] : memref<1x4x1xf32, #tpu.memory_space<vmem>>, vector<1x4x1xf32>
      tpu.vector_store %arg8[%c0_14, %c0_15, %c0_16], %32 {strides = array<i32>} : memref<1x4x1xf32, #tpu.memory_space<vmem>>, vector<1x4x1xf32>,
      %c0_17 = arith.constant 0 : index
      %c0_18 = arith.constant 0 : index
      %c0_19 = arith.constant 0 : index
      %35 = vector.load %arg9[%c0_17, %c0_18, %c0_19] : memref<1x4x1xf32, #tpu.memory_space<vmem>>, vector<1x4x1xf32>
      tpu.vector_store %arg9[%c0_17, %c0_18, %c0_19], %32 {strides = array<i32>} : memref<1x4x1xf32, #tpu.memory_space<vmem>>, vector<1x4x1xf32>,
      %c0_20 = arith.constant 0 : index
      %c0_21 = arith.constant 0 : index
      %c0_22 = arith.constant 0 : index
      %36 = vector.load %arg10[%c0_20, %c0_21, %c0_22] : memref<1x4x1xf32, #tpu.memory_space<vmem>>, vector<1x4x1xf32>
      tpu.vector_store %arg10[%c0_20, %c0_21, %c0_22], %32 {strides = array<i32>} : memref<1x4x1xf32, #tpu.memory_space<vmem>>, vector<1x4x1xf32>,
    } else {
    }
    %c0_i32_8 = arith.constant 0 : i32
    %26 = arith.cmpi eq, %arg1, %c0_i32_8 : i32
    %27 = arith.extui %26 : i1 to i32
    %c0_i32_9 = arith.constant 0 : i32
    %28 = arith.cmpi ne, %27, %c0_i32_9 : i32
    scf.if %28 {
      %c0 = arith.constant 0 : index
      %c0_12 = arith.constant 0 : index
      %c0_13 = arith.constant 0 : index
      %32 = vector.load %arg4[%c0, %c0_12, %c0_13] : memref<2x4x512xf32, #tpu.memory_space<vmem>>, vector<2x4x512xf32>
      %cst = arith.constant 0.000000e+00 : f32
      %33 = vector.shape_cast %18 : vector<1x1x512xi1> to vector<1x1x512xi1>
      %34 = vector.broadcast %33 : vector<1x1x512xi1> to vector<2x4x512xi1>
      %35 = vector.broadcast %cst : f32 to vector<2x4x512xf32>
      %36 = arith.select %34, %32, %35 : vector<2x4x512xi1>, vector<2x4x512xf32>
      %cst_14 = arith.constant 0.000000e+00 : f32
      %37 = vector.shape_cast %18 : vector<1x1x512xi1> to vector<1x1x512xi1>
      %38 = vector.broadcast %37 : vector<1x1x512xi1> to vector<2x4x512xi1>
      %39 = vector.broadcast %cst_14 : f32 to vector<2x4x512xf32>
      %40 = arith.select %38, %39, %32 : vector<2x4x512xi1>, vector<2x4x512xf32>
      %c0_15 = arith.constant 0 : index
      %c0_16 = arith.constant 0 : index
      %c0_17 = arith.constant 0 : index
      %41 = vector.load %arg7[%c0_15, %c0_16, %c0_17] : memref<1x4x1xf32, #tpu.memory_space<vmem>>, vector<1x4x1xf32>
      %cst_18 = arith.constant dense<0.000000e+00> : vector<4xf32>
      %42 = vector.multi_reduction <add>, %36, %cst_18 [0, 2] : vector<2x4x512xf32> to vector<4xf32>
      %43 = vector.shape_cast %42 : vector<4xf32> to vector<1x4x1xf32>
      %44 = arith.addf %41, %43 : vector<1x4x1xf32>
      %c0_19 = arith.constant 0 : index
      %c0_20 = arith.constant 0 : index
      %c0_21 = arith.constant 0 : index
      %45 = vector.load %arg7[%c0_19, %c0_20, %c0_21] : memref<1x4x1xf32, #tpu.memory_space<vmem>>, vector<1x4x1xf32>
      tpu.vector_store %arg7[%c0_19, %c0_20, %c0_21], %44 {strides = array<i32>} : memref<1x4x1xf32, #tpu.memory_space<vmem>>, vector<1x4x1xf32>,
      %c0_22 = arith.constant 0 : index
      %c0_23 = arith.constant 0 : index
      %c0_24 = arith.constant 0 : index
      %46 = vector.load %arg9[%c0_22, %c0_23, %c0_24] : memref<1x4x1xf32, #tpu.memory_space<vmem>>, vector<1x4x1xf32>
      %cst_25 = arith.constant dense<0.000000e+00> : vector<4xf32>
      %47 = vector.multi_reduction <add>, %40, %cst_25 [0, 2] : vector<2x4x512xf32> to vector<4xf32>
      %48 = vector.shape_cast %47 : vector<4xf32> to vector<1x4x1xf32>
      %49 = arith.addf %46, %48 : vector<1x4x1xf32>
      %c0_26 = arith.constant 0 : index
      %c0_27 = arith.constant 0 : index
      %c0_28 = arith.constant 0 : index
      %50 = vector.load %arg9[%c0_26, %c0_27, %c0_28] : memref<1x4x1xf32, #tpu.memory_space<vmem>>, vector<1x4x1xf32>
      tpu.vector_store %arg9[%c0_26, %c0_27, %c0_28], %49 {strides = array<i32>} : memref<1x4x1xf32, #tpu.memory_space<vmem>>, vector<1x4x1xf32>,
      %c0_29 = arith.constant 0 : index
      %c0_30 = arith.constant 0 : index
      %c0_31 = arith.constant 0 : index
      %51 = vector.load %arg8[%c0_29, %c0_30, %c0_31] : memref<1x4x1xf32, #tpu.memory_space<vmem>>, vector<1x4x1xf32>
      %52 = arith.mulf %36, %36 : vector<2x4x512xf32>
      %cst_32 = arith.constant dense<0.000000e+00> : vector<4xf32>
      %53 = vector.multi_reduction <add>, %52, %cst_32 [0, 2] : vector<2x4x512xf32> to vector<4xf32>
      %54 = vector.shape_cast %53 : vector<4xf32> to vector<1x4x1xf32>
      %55 = arith.addf %51, %54 : vector<1x4x1xf32>
      %c0_33 = arith.constant 0 : index
      %c0_34 = arith.constant 0 : index
      %c0_35 = arith.constant 0 : index
      %56 = vector.load %arg8[%c0_33, %c0_34, %c0_35] : memref<1x4x1xf32, #tpu.memory_space<vmem>>, vector<1x4x1xf32>
      tpu.vector_store %arg8[%c0_33, %c0_34, %c0_35], %55 {strides = array<i32>} : memref<1x4x1xf32, #tpu.memory_space<vmem>>, vector<1x4x1xf32>,
      %c0_36 = arith.constant 0 : index
      %c0_37 = arith.constant 0 : index
      %c0_38 = arith.constant 0 : index
      %57 = vector.load %arg10[%c0_36, %c0_37, %c0_38] : memref<1x4x1xf32, #tpu.memory_space<vmem>>, vector<1x4x1xf32>
      %58 = arith.mulf %40, %40 : vector<2x4x512xf32>
      %cst_39 = arith.constant dense<0.000000e+00> : vector<4xf32>
      %59 = vector.multi_reduction <add>, %58, %cst_39 [0, 2] : vector<2x4x512xf32> to vector<4xf32>
      %60 = vector.shape_cast %59 : vector<4xf32> to vector<1x4x1xf32>
      %61 = arith.addf %57, %60 : vector<1x4x1xf32>
      %c0_40 = arith.constant 0 : index
      %c0_41 = arith.constant 0 : index
      %c0_42 = arith.constant 0 : index
      %62 = vector.load %arg10[%c0_40, %c0_41, %c0_42] : memref<1x4x1xf32, #tpu.memory_space<vmem>>, vector<1x4x1xf32>
      tpu.vector_store %arg10[%c0_40, %c0_41, %c0_42], %61 {strides = array<i32>} : memref<1x4x1xf32, #tpu.memory_space<vmem>>, vector<1x4x1xf32>,
    } else {
    }
    %c1_i32_10 = arith.constant 1 : i32
    %29 = arith.cmpi eq, %arg1, %c1_i32_10 : i32
    %30 = arith.extui %29 : i1 to i32
    %c0_i32_11 = arith.constant 0 : i32
    %31 = arith.cmpi ne, %30, %c0_i32_11 : i32
    scf.if %31 {
      %c0 = arith.constant 0 : index
      %c0_12 = arith.constant 0 : index
      %32 = vector.load %arg5[%c0, %c0_12] : memref<4x4xf32, #tpu.memory_space<vmem>>, vector<4x4xf32>
      %33 = vector.extract_strided_slice %32 {offsets = [0, 0], sizes = [4, 1], strides = [1, 1]} : vector<4x4xf32> to vector<4x1xf32>
      %34 = vector.shape_cast %33 : vector<4x1xf32> to vector<1x4x1xf32>
      %35 = vector.extract_strided_slice %32 {offsets = [0, 1], sizes = [4, 1], strides = [1, 1]} : vector<4x4xf32> to vector<4x1xf32>
      %36 = vector.shape_cast %35 : vector<4x1xf32> to vector<1x4x1xf32>
      %37 = vector.extract_strided_slice %32 {offsets = [0, 2], sizes = [4, 1], strides = [1, 1]} : vector<4x4xf32> to vector<4x1xf32>
      %38 = vector.shape_cast %37 : vector<4x1xf32> to vector<1x4x1xf32>
      %39 = vector.extract_strided_slice %32 {offsets = [0, 3], sizes = [4, 1], strides = [1, 1]} : vector<4x4xf32> to vector<4x1xf32>
      %40 = vector.shape_cast %39 : vector<4x1xf32> to vector<1x4x1xf32>
      %c0_13 = arith.constant 0 : index
      %c0_14 = arith.constant 0 : index
      %c0_15 = arith.constant 0 : index
      %41 = vector.load %arg7[%c0_13, %c0_14, %c0_15] : memref<1x4x1xf32, #tpu.memory_space<vmem>>, vector<1x4x1xf32>
      %cst = arith.constant 0.001953125 : f32
      %42 = vector.broadcast %cst : f32 to vector<1x4x1xf32>
      %43 = arith.mulf %41, %42 : vector<1x4x1xf32>
      %c0_16 = arith.constant 0 : index
      %c0_17 = arith.constant 0 : index
      %c0_18 = arith.constant 0 : index
      %44 = vector.load %arg9[%c0_16, %c0_17, %c0_18] : memref<1x4x1xf32, #tpu.memory_space<vmem>>, vector<1x4x1xf32>
      %cst_19 = arith.constant 0.001953125 : f32
      %45 = vector.broadcast %cst_19 : f32 to vector<1x4x1xf32>
      %46 = arith.mulf %44, %45 : vector<1x4x1xf32>
      %c0_20 = arith.constant 0 : index
      %c0_21 = arith.constant 0 : index
      %c0_22 = arith.constant 0 : index
      %47 = vector.load %arg8[%c0_20, %c0_21, %c0_22] : memref<1x4x1xf32, #tpu.memory_space<vmem>>, vector<1x4x1xf32>
      %cst_23 = arith.constant 0.001953125 : f32
      %48 = vector.broadcast %cst_23 : f32 to vector<1x4x1xf32>
      %49 = arith.mulf %47, %48 : vector<1x4x1xf32>
      %50 = arith.mulf %43, %43 : vector<1x4x1xf32>
      %51 = arith.subf %49, %50 : vector<1x4x1xf32>
      %cst_24 = arith.constant 0.000000e+00 : f32
      %52 = vector.broadcast %cst_24 : f32 to vector<1x4x1xf32>
      %53 = arith.maximumf %51, %52 : vector<1x4x1xf32>
      %c0_25 = arith.constant 0 : index
      %c0_26 = arith.constant 0 : index
      %c0_27 = arith.constant 0 : index
      %54 = vector.load %arg10[%c0_25, %c0_26, %c0_27] : memref<1x4x1xf32, #tpu.memory_space<vmem>>, vector<1x4x1xf32>
      %cst_28 = arith.constant 0.001953125 : f32
      %55 = vector.broadcast %cst_28 : f32 to vector<1x4x1xf32>
      %56 = arith.mulf %54, %55 : vector<1x4x1xf32>
      %57 = arith.mulf %46, %46 : vector<1x4x1xf32>
      %58 = arith.subf %56, %57 : vector<1x4x1xf32>
      %cst_29 = arith.constant 0.000000e+00 : f32
      %59 = vector.broadcast %cst_29 : f32 to vector<1x4x1xf32>
      %60 = arith.maximumf %58, %59 : vector<1x4x1xf32>
      %cst_30 = arith.constant 9.99999974E-6 : f32
      %61 = vector.broadcast %cst_30 : f32 to vector<1x4x1xf32>
      %62 = arith.addf %53, %61 : vector<1x4x1xf32>
      %63 = math.rsqrt %62 : vector<1x4x1xf32>
      %64 = arith.mulf %63, %34 : vector<1x4x1xf32>
      %cst_31 = arith.constant 9.99999974E-6 : f32
      %65 = vector.broadcast %cst_31 : f32 to vector<1x4x1xf32>
      %66 = arith.addf %60, %65 : vector<1x4x1xf32>
      %67 = math.rsqrt %66 : vector<1x4x1xf32>
      %68 = arith.mulf %67, %38 : vector<1x4x1xf32>
      %69 = arith.mulf %43, %64 : vector<1x4x1xf32>
      %70 = arith.subf %36, %69 : vector<1x4x1xf32>
      %71 = arith.mulf %46, %68 : vector<1x4x1xf32>
      %72 = arith.subf %40, %71 : vector<1x4x1xf32>
      %73 = vector.shape_cast %18 : vector<1x1x512xi1> to vector<1x1x512xi1>
      %74 = vector.broadcast %73 : vector<1x1x512xi1> to vector<1x4x512xi1>
      %75 = vector.shape_cast %64 : vector<1x4x1xf32> to vector<1x4x1xf32>
      %76 = vector.broadcast %75 : vector<1x4x1xf32> to vector<1x4x512xf32>
      %77 = vector.shape_cast %68 : vector<1x4x1xf32> to vector<1x4x1xf32>
      %78 = vector.broadcast %77 : vector<1x4x1xf32> to vector<1x4x512xf32>
      %79 = arith.select %74, %76, %78 : vector<1x4x512xi1>, vector<1x4x512xf32>
      %80 = vector.shape_cast %18 : vector<1x1x512xi1> to vector<1x1x512xi1>
      %81 = vector.broadcast %80 : vector<1x1x512xi1> to vector<1x4x512xi1>
      %82 = vector.shape_cast %70 : vector<1x4x1xf32> to vector<1x4x1xf32>
      %83 = vector.broadcast %82 : vector<1x4x1xf32> to vector<1x4x512xf32>
      %84 = vector.shape_cast %72 : vector<1x4x1xf32> to vector<1x4x1xf32>
      %85 = vector.broadcast %84 : vector<1x4x1xf32> to vector<1x4x512xf32>
      %86 = arith.select %81, %83, %85 : vector<1x4x512xi1>, vector<1x4x512xf32>
      %c0_32 = arith.constant 0 : index
      %c0_33 = arith.constant 0 : index
      %c0_34 = arith.constant 0 : index
      %87 = vector.load %arg4[%c0_32, %c0_33, %c0_34] : memref<2x4x512xf32, #tpu.memory_space<vmem>>, vector<2x4x512xf32>
      %88 = vector.broadcast %79 : vector<1x4x512xf32> to vector<2x4x512xf32>
      %89 = arith.mulf %87, %88 : vector<2x4x512xf32>
      %90 = vector.broadcast %86 : vector<1x4x512xf32> to vector<2x4x512xf32>
      %91 = arith.addf %89, %90 : vector<2x4x512xf32>
      %c0_35 = arith.constant 0 : index
      %c0_36 = arith.constant 0 : index
      %c0_37 = arith.constant 0 : index
      %92 = vector.load %arg6[%c0_35, %c0_36, %c0_37] : memref<2x4x512xf32, #tpu.memory_space<vmem>>, vector<2x4x512xf32>
      tpu.vector_store %arg6[%c0_35, %c0_36, %c0_37], %91 {strides = array<i32>} : memref<2x4x512xf32, #tpu.memory_space<vmem>>, vector<2x4x512xf32>,
    } else {
    }
    return
  }
  func.func @transform_0(%arg0: i32, %arg1: i32, %arg2: i32, %arg3: i32) -> (i32, i32, i32) {
    %c0_i32 = arith.constant 0 : i32
    return %arg2, %arg0, %arg3 : i32, i32, i32
  }
  func.func @transform_1(%arg0: i32, %arg1: i32, %arg2: i32, %arg3: i32) -> (i32, i32) {
    %c0_i32 = arith.constant 0 : i32
    %c0_i32_0 = arith.constant 0 : i32
    return %arg0, %c0_i32 : i32, i32
  }
  func.func @transform_2(%arg0: i32, %arg1: i32, %arg2: i32, %arg3: i32) -> (i32, i32, i32) {
    %0 = arith.muli %arg2, %arg1 : i32
    %1 = arith.muli %arg3, %arg1 : i32
    %c0_i32 = arith.constant 0 : i32
    return %0, %arg0, %1 : i32, i32, i32
  }
}

</mosaic_0001>

<llo_original>
// kernel: tpu_custom_call.1
$region0: #{tpu_custom_call.1}
  #allocation0 [shape = 'u32[]', space=smem, size = 0x4, offset = 0x4, fixed_abs, tag = 'smem constant byte address 0x4 - core index']
  #allocation1 [shape = 'u32[144,128]{1,0:T(1,128)}', space=vmem, size = 0x12000, scoped, tag = 'internal scratch']
  #allocation2 [shape = 'f32[1,4,1]{2,1,0:T(4,128)}', space=vmem, size = 0x800, scoped, tag = 'scratch operand']
  #allocation3 [shape = 'f32[1,4,1]{2,1,0:T(4,128)}', space=vmem, size = 0x800, scoped, tag = 'scratch operand']
  #allocation4 [shape = 'f32[1,4,1]{2,1,0:T(4,128)}', space=vmem, size = 0x800, scoped, tag = 'scratch operand']
  #allocation5 [shape = 'f32[1,4,1]{2,1,0:T(4,128)}', space=vmem, size = 0x800, scoped, tag = 'scratch operand']
  %s0 = inlined_call_operand.hbm [shape: f32[2,4,512], index: 0, kind: input, shape index: {}]
  %s1 = inlined_call_operand.hbm [shape: f32[4,4], index: 1, kind: input, shape index: {}]
  %s2 = inlined_call_operand.hbm [shape: f32[2,4,512], index: 2, kind: output, shape index: {}]
  %s3 = sld [smem:[#allocation0]]
  $region61: #{tpu_custom_call.1} parent=0
    _
  %s5 = ssub.s32 1, %s3
  %s6 = scalar_select 0, %s5, %s3
  $region1: #{tpu_custom_call.1} parent=0
    #allocation6 [shape = 'u8[16384]{0}', space=vmem, size = 0x4000, scoped, tag = 'input window, operand 0, single buffered']
    #allocation7 [shape = 's32[2]{0}', space=sflag, size = 0x8, scoped, tag = 'scoped memory for tpu_custom_call.1']
    #allocation8 [shape = 's32[2]{0}', space=sflag, size = 0x8, scoped, tag = 'scoped memory for tpu_custom_call.1']
    #allocation9 [shape = 'u8[2048]{0}', space=vmem, size = 0x800, scoped, tag = 'input window, operand 1, single buffered']
    #allocation10 [shape = 's32[1]{0}', space=sflag, size = 0x4, scoped, tag = 'scoped memory for tpu_custom_call.1']
    #allocation11 [shape = 'u8[32768]{0}', space=vmem, size = 0x8000, scoped, tag = 'output window, operand 0']
    %7 = vsyncpa [#allocation7], 0
    %8 = vsyncpa [#allocation10], 0
    %9 = vsyncpa [#allocation8], 0
    %s10 = scalar_lea.sflag [#allocation8], 1
    %11 = vsyncpa %s10, 0
    loop: start=0, step=1, limit=4
    $region2: #{tpu_custom_call.1} parent=1 // loop_pre_header
      _
    $region3: #{tpu_custom_call.1} parent=1 // loop_header
      %s13 = sphi 0, %s17
      %p14 = scmp.ge.s32.totalorder %s13, 4
      %s20 = sphi 0, %s46
      %s21 = sphi 0, %s42
      %s22 = sphi 0, %s38
      %s23 = sphi 0, %s34
      %s24 = sphi 0, %s20
      %s25 = sphi 0, %s21
      %s26 = sphi 0, %s22
      %s27 = sphi 0, %s23
      %s28 = sphi 0, %s24
      %s29 = sphi 0, %s25
      %s30 = sphi 0, %s26
      %s31 = sphi 0, %s27
      %s53 = sphi 0, %s55
      %s56 = sphi 0, %s53
      %s57 = sphi 0, %s56
      %s73 = sphi 0, %s57
      %s79 = sphi 0, %s81
      %s82 = sphi 0, %s79
      %s83 = sphi 0, %s82
      %s99 = sphi 0, %s83
      %s113 = sphi 0, %s115
      %s116 = sphi 0, %s113
      %s117 = sphi 0, %s116
      %s133 = sphi 0, %s117
    $region4: #{tpu_custom_call.1} parent=1 // loop_header_branch
      %16 = sbr.rel (%p14) target = $region8
    $region5: #{tpu_custom_call.1} parent=1 // loop_body
      %s18 = ssub.s32 %s13, 1
      %s19 = ssub.s32 %s13, 2
      %s32 = sadd.s32 1, %s23
      %p33 = scmp.ge.s32.totalorder %s32, 1
      %s34 = scalar_select %p33, 0, %s32
      %s35 = sadd.s32 1, %s22
      %s36 = scalar_select %p33, %s35, %s22
      %p37 = scmp.ge.s32.totalorder %s36, 1
      %s38 = scalar_select %p37, 0, %s36
      %s39 = sadd.s32 1, %s21
      %s40 = scalar_select %p37, %s39, %s21
      %p41 = scmp.ge.s32.totalorder %s40, 2
      %s42 = scalar_select %p41, 0, %s40
      %s43 = sadd.s32 1, %s20
      %s44 = scalar_select %p41, %s43, %s20
      %p45 = scmp.ge.s32.totalorder %s44, 1
      %s46 = scalar_select %p45, 0, %s44
      %s47 = ssub.s32 %s22, %s38
      %s48 = ssub.s32 %s20, %s46
      %s49 = sor.u32 %s47, %s48
      %s50 = ssub.s32 %s23, %s34
      %s51 = sor.u32 %s49, %s50
      %p52 = scmp.eq.s32.totalorder %s51, 0
      %s54 = sadd.s32 %s53, 1
      %s55 = scalar_select %p52, %s53, %s54
      %p58 = pneg %p52
      %p59 = scmp.eq.s32.totalorder %s13, 1
      %p60 = por %p58, %p59
      %p61 = scmp.ne.s32.totalorder %s53, %s56
      %p62 = scmp.eq.s32.totalorder %s13, 0
      %p63 = por %p61, %p62
      %p64 = scmp.ne.s32.totalorder %s53, %s56
      %p65 = scmp.eq.s32.totalorder %s18, 1
      %p66 = por %p64, %p65
      %p67 = scmp.ne.s32.totalorder %s56, %s57
      %p68 = scmp.eq.s32.totalorder %s18, 0
      %p69 = por %p67, %p68
      %p70 = scmp.ne.s32.totalorder %s56, %s57
      %p71 = scmp.eq.s32.totalorder %s19, 1
      %p72 = por %p70, %p71
      %p74 = scmp.ne.s32.totalorder %s57, %s73
      %p75 = scmp.eq.s32.totalorder %s19, 0
      %p76 = por %p74, %p75
      %s77 = ssub.s32 %s20, %s46
      %p78 = scmp.eq.s32.totalorder %s77, 0
      %s80 = sadd.s32 %s79, 1
      %s81 = scalar_select %p78, %s79, %s80
      %p84 = pneg %p78
      %p85 = scmp.eq.s32.totalorder %s13, 1
      %p86 = por %p84, %p85
      %p87 = scmp.ne.s32.totalorder %s79, %s82
      %p88 = scmp.eq.s32.totalorder %s13, 0
      %p89 = por %p87, %p88
      %p90 = scmp.ne.s32.totalorder %s79, %s82
      %p91 = scmp.eq.s32.totalorder %s18, 1
      %p92 = por %p90, %p91
      %p93 = scmp.ne.s32.totalorder %s82, %s83
      %p94 = scmp.eq.s32.totalorder %s18, 0
      %p95 = por %p93, %p94
      %p96 = scmp.ne.s32.totalorder %s82, %s83
      %p97 = scmp.eq.s32.totalorder %s19, 1
      %p98 = por %p96, %p97
      %p100 = scmp.ne.s32.totalorder %s83, %s99
      %p101 = scmp.eq.s32.totalorder %s19, 0
      %p102 = por %p100, %p101
      %s103 = smul.u32 %s22, %s21
      %s104 = smul.u32 %s23, %s21
      %s105 = smul.u32 %s38, %s42
      %s106 = smul.u32 %s34, %s42
      %s107 = ssub.s32 %s103, %s105
      %s108 = ssub.s32 %s20, %s46
      %s109 = sor.u32 %s107, %s108
      %s110 = ssub.s32 %s104, %s106
      %s111 = sor.u32 %s109, %s110
      %p112 = scmp.eq.s32.totalorder %s111, 0
      %s114 = sadd.s32 %s113, 1
      %s115 = scalar_select %p112, %s113, %s114
      %p118 = pneg %p112
      %p119 = scmp.eq.s32.totalorder %s13, 1
      %p120 = por %p118, %p119
      %p121 = scmp.ne.s32.totalorder %s113, %s116
      %p122 = scmp.eq.s32.totalorder %s13, 0
      %p123 = por %p121, %p122
      %p124 = scmp.ne.s32.totalorder %s113, %s116
      %p125 = scmp.eq.s32.totalorder %s18, 1
      %p126 = por %p124, %p125
      %p127 = scmp.ne.s32.totalorder %s116, %s117
      %p128 = scmp.eq.s32.totalorder %s18, 0
      %p129 = por %p127, %p128
      %p130 = scmp.ne.s32.totalorder %s116, %s117
      %p131 = scmp.eq.s32.totalorder %s19, 1
      %p132 = por %p130, %p131
      %p134 = scmp.ne.s32.totalorder %s117, %s133
      %p135 = scmp.eq.s32.totalorder %s19, 0
      %p136 = por %p134, %p135
      %p137 = scmp.le.s32.totalorder 1, %s13
      %p138 = scmp.lt.s32.totalorder %s13, 3
      %p139 = pnand %p137, %p138
      %p140 = pneg %p139
      // Predicated region
      $region9: #{tpu_custom_call.1} parent=5 // pred_check
        _
      $region10: #{tpu_custom_call.1} parent=5 // pred_check_branch
        %142 = sbr.rel (%p139) target = $region12
      $region11: #{tpu_custom_call.1} parent=5 // pred_region
        %s143 = ssub.s32 %s13, 1
        // Predicated region
        $region13: #{tpu_custom_call.1} parent=11 // pred_check
          %p144 = pneg %p69
        $region14: #{tpu_custom_call.1} parent=11 // pred_check_branch
          %146 = sbr.rel (%p144) target = $region16
        $region15: #{tpu_custom_call.1} parent=11 // pred_region
          %s147 = smul.u32 2, %s26
          %s148 = smul.u32 4, %s27
          %s150 = ssub.s32 512, 512
          %151 = vsyncadd [#allocation7], %s150
          %s152 = smul.addr %s24, 4
          %s153 = sadd.s32 %s148, %s152
          %s154 = smul.addr %s147, 4
          %s155 = sadd.s32 %s153, %s154
          %s156 = smul.addr %s155, 64
          %s157 = scalar_lea.hbm %s0, %s156
          %s158 = sshll.u32 [#allocation6], 4
          %s159 = int_to_ptr.vmem [resolvable:$true] %s158
          %164 = dma.hbm_to_vmem [thread:$0]  %s157, 512, %s159, [#allocation7], 256, 256, 16
        $region16: #{tpu_custom_call.1} parent=11 // pred_fallthru
          _
        // Predicated region
        $region17: #{tpu_custom_call.1} parent=11 // pred_check
          %p165 = pneg %p95
        $region18: #{tpu_custom_call.1} parent=11 // pred_check_branch
          %167 = sbr.rel (%p165) target = $region20
        $region19: #{tpu_custom_call.1} parent=11 // pred_region
          %s169 = ssub.s32 64, 64
          %170 = vsyncadd [#allocation10], %s169
          %s171 = smul.addr %s24, 64
          %s172 = scalar_lea.hbm %s1, %s171
          %s174 = sshll.u32 [#allocation9], 4
          %s175 = int_to_ptr.vmem [resolvable:$true] %s174
          %177 = dma.hbm_to_vmem [thread:$0]  %s172, 64, %s175, [#allocation10]
        $region20: #{tpu_custom_call.1} parent=11 // pred_fallthru
          _
      $region12: #{tpu_custom_call.1} parent=5 // pred_fallthru
        _
      %p178 = scmp.lt.s32.totalorder %s13, 2
      // Predicated region
      $region21: #{tpu_custom_call.1} parent=5 // pred_check
        %p179 = pneg %p178
      $region22: #{tpu_custom_call.1} parent=5 // pred_check_branch
        %181 = sbr.rel (%p179) target = $region24
      $region23: #{tpu_custom_call.1} parent=5 // pred_region
        _
      $region24: #{tpu_custom_call.1} parent=5 // pred_fallthru
        _
      %p182 = scmp.le.s32.totalorder 1, %s13
      %p183 = scmp.lt.s32.totalorder %s13, 3
      %p184 = pnand %p182, %p183
      %p185 = pneg %p184
      // Predicated region
      $region25: #{tpu_custom_call.1} parent=5 // pred_check
        _
      $region26: #{tpu_custom_call.1} parent=5 // pred_check_branch
        %187 = sbr.rel (%p184) target = $region28
      $region27: #{tpu_custom_call.1} parent=5 // pred_region
        %s188 = ssub.s32 %s13, 1
        // Predicated region
        $region29: #{tpu_custom_call.1} parent=27 // pred_check
          %p189 = pneg %p69
        $region30: #{tpu_custom_call.1} parent=27 // pred_check_branch
          %191 = sbr.rel (%p189) target = $region32
        $region31: #{tpu_custom_call.1} parent=27 // pred_region
          %192 = dma.done [#allocation7], 512
        $region32: #{tpu_custom_call.1} parent=27 // pred_fallthru
          _
        // Predicated region
        $region33: #{tpu_custom_call.1} parent=27 // pred_check
          %p193 = pneg %p95
        $region34: #{tpu_custom_call.1} parent=27 // pred_check_branch
          %195 = sbr.rel (%p193) target = $region36
        $region35: #{tpu_custom_call.1} parent=27 // pred_region
          %196 = dma.done [#allocation10], 64
        $region36: #{tpu_custom_call.1} parent=27 // pred_fallthru
          _
        %p197 = pneg %p69
        %p198 = pneg %p66
        %p199 = pneg %p95
        %p200 = pneg %p92
        %p201 = pneg %p129
        %p202 = pneg %p126
        %s203 = sand.u32 %s116, 1
        %s204 = scalar_lea.sflag [#allocation8], %s203
        %s205 = sand.u32 %s116, 1
        %s206 = smul.addr %s205, 32
        %s207 = scalar_lea.vmem [#allocation11], %s206
        %s208 = smul.u32 2, %s26
        %s209 = smul.u32 4, %s27
        %s210 = smul.u32 %s26, %s25
        %s211 = smul.u32 %s27, %s25
        %s212 = smul.u32 2, %s210
        %s213 = smul.u32 4, %s211
        %v214 = vlaneseq
        %v215 = vand.u32 %v214, 127
        %v216 = vadd.s32 %v215, 128
        %v217 = vadd.s32 %v215, 256
        %v218 = vadd.s32 %v215, 384
        %vm219 = vcmp.lt.s32.totalorder %v215, 0
        %v220 = vsub.s32 0, %v215
        %v221 = vsel %vm219, %v220, %v215
        %v222 = vshrl.u32 %v221, 1
        %v223 = vand.u32 %v221, 1
        %v224 = vsub.s32 0, %v223
        %v225 = vsel %vm219, %v224, %v223
        %vm226 = vcmp.lt.s32.totalorder %v216, 0
        %v227 = vsub.s32 0, %v216
        %v228 = vsel %vm226, %v227, %v216
        %v229 = vshrl.u32 %v228, 1
        %v230 = vand.u32 %v228, 1
        %v231 = vsub.s32 0, %v230
        %v232 = vsel %vm226, %v231, %v230
        %vm233 = vcmp.lt.s32.totalorder %v217, 0
        %v234 = vsub.s32 0, %v217
        %v235 = vsel %vm233, %v234, %v217
        %v236 = vshrl.u32 %v235, 1
        %v237 = vand.u32 %v235, 1
        %v238 = vsub.s32 0, %v237
        %v239 = vsel %vm233, %v238, %v237
        %vm240 = vcmp.lt.s32.totalorder %v218, 0
        %v241 = vsub.s32 0, %v218
        %v242 = vsel %vm240, %v241, %v218
        %v243 = vshrl.u32 %v242, 1
        %v244 = vand.u32 %v242, 1
        %v245 = vsub.s32 0, %v244
        %v246 = vsel %vm240, %v245, %v244
        %vm247 = vcmp.ne.s32.totalorder %v225, 0
        %vm248 = vcmp.ne.s32.totalorder %v232, 0
        %vm249 = vcmp.ne.s32.totalorder %v239, 0
        %vm250 = vcmp.ne.s32.totalorder %v246, 0
        %vm251 = vcmp.lt.s32.totalorder %v225, 0
        %vm252 = vcmp.lt.s32.totalorder %v232, 0
        %vm253 = vcmp.lt.s32.totalorder %v239, 0
        %vm254 = vcmp.lt.s32.totalorder %v246, 0
        %vm255 = vmand %vm251, %vm247
        %vm256 = vmand %vm252, %vm248
        %vm257 = vmand %vm253, %vm249
        %vm258 = vmand %vm254, %vm250
        %v259 = vadd.s32 %v225, 2
        %v260 = vadd.s32 %v232, 2
        %v261 = vadd.s32 %v239, 2
        %v262 = vadd.s32 %v246, 2
        %v263 = vsel %vm255, %v259, %v225
        %v264 = vsel %vm256, %v260, %v232
        %v265 = vsel %vm257, %v261, %v239
        %v266 = vsel %vm258, %v262, %v246
        %vm267 = vcmp.eq.s32.totalorder %v263, 0
        %vm268 = vcmp.eq.s32.totalorder %v264, 0
        %vm269 = vcmp.eq.s32.totalorder %v265, 0
        %vm270 = vcmp.eq.s32.totalorder %v266, 0
        %p271 = scmp.eq.s32.totalorder %s25, 0
        %p272 = scmp.eq.s32.totalorder %s26, 0
        %p273 = pnand %p271, %p272
        %p274 = pneg %p273
        %p275 = scmp.eq.s32.totalorder %s27, 0
        %p276 = pnand %p274, %p275
        %p277 = pneg %p276
        // Predicated region
        $region37: #{tpu_custom_call.1} parent=27 // pred_check
          _
        $region38: #{tpu_custom_call.1} parent=27 // pred_check_branch
          %279 = sbr.rel (%p276) target = $region40
        $region39: #{tpu_custom_call.1} parent=27 // pred_region
          %vm280 = vcmask 3072
          %281 = vst.msk [vmem:[#allocation2] sm:$0xf] %vm280, 0.0
          %282 = vst.msk [vmem:[#allocation3] sm:$0xf] %vm280, 0.0
          %283 = vst.msk [vmem:[#allocation4] sm:$0xf] %vm280, 0.0
          %284 = vst.msk [vmem:[#allocation5] sm:$0xf] %vm280, 0.0
        $region40: #{tpu_custom_call.1} parent=27 // pred_fallthru
          _
        // Predicated region
        $region41: #{tpu_custom_call.1} parent=27 // pred_check
          %p285 = pneg %p271
        $region42: #{tpu_custom_call.1} parent=27 // pred_check_branch
          %287 = sbr.rel (%p285) target = $region44
        $region43: #{tpu_custom_call.1} parent=27 // pred_region
          %v288 = vld [vmem:[#allocation6] sm:$0xff]
          %v289 = vld [vmem:[#allocation6 + $0x8] sm:$0xff]
          %v290 = vld [vmem:[#allocation6 + $0x10] sm:$0xff]
          %v291 = vld [vmem:[#allocation6 + $0x18] sm:$0xff]
          %v292 = vsel %vm267, 1, 0
          %v293 = vsel %vm268, 1, 0
          %v294 = vsel %vm269, 1, 0
          %v295 = vsel %vm270, 1, 0
          %vm296 = vcmp.eq.s32.totalorder %v292, 1
          %vm297 = vcmp.eq.s32.totalorder %v293, 1
          %vm298 = vcmp.eq.s32.totalorder %v294, 1
          %vm299 = vcmp.eq.s32.totalorder %v295, 1
          %v304 = vcombine.high %v288, %v288
          %v305 = vcombine.high %v289, %v289
          %v306 = vcombine.high %v290, %v290
          %v307 = vcombine.high %v291, %v291
          %v312 = vsel %vm296, %v288, 0.0
          %v313 = vsel %vm297, %v304, 0.0
          %v314 = vsel %vm298, %v289, 0.0
          %v315 = vsel %vm299, %v305, 0.0
          %v316 = vsel %vm296, %v290, 0.0
          %v317 = vsel %vm297, %v306, 0.0
          %v318 = vsel %vm298, %v291, 0.0
          %v319 = vsel %vm299, %v307, 0.0
          %v320 = vsel %vm296, 0.0, %v288
          %v321 = vsel %vm297, 0.0, %v304
          %v322 = vsel %vm298, 0.0, %v289
          %v323 = vsel %vm299, 0.0, %v305
          %v324 = vsel %vm296, 0.0, %v290
          %v325 = vsel %vm297, 0.0, %v306
          %v326 = vsel %vm298, 0.0, %v291
          %v327 = vsel %vm299, 0.0, %v307
          %v328 = vld [vmem:[#allocation2] sm:$0xf]
          %vm329 = vcmask 1043456
          %v330 = vsel %vm329, %v312, 0.0
          %v331 = vsel %vm329, %v313, 0.0
          %v332 = vadd.f32 %v330, %v331
          %v333 = vsel %vm329, %v314, 0.0
          %v334 = vadd.f32 %v332, %v333
          %v335 = vsel %vm329, %v315, 0.0
          %v336 = vadd.f32 %v334, %v335
          %v337 = vsel %vm329, %v316, 0.0
          %v338 = vadd.f32 %v336, %v337
          %v339 = vsel %vm329, %v317, 0.0
          %v340 = vadd.f32 %v338, %v339
          %v341 = vsel %vm329, %v318, 0.0
          %v342 = vadd.f32 %v340, %v341
          %v343 = vsel %vm329, %v319, 0.0
          %v344 = vadd.f32 %v342, %v343
          %345 = vadd.xlane.f32.xlu0 %v344
          %v346 = vpop.xlane.xlu0 %345
          %v347 = vadd.f32 %v328, %v346
          %vm348 = vcmask 3072
          %349 = vst.msk [vmem:[#allocation2] sm:$0xf] %vm348, %v347
          %v350 = vld [vmem:[#allocation4] sm:$0xf]
          %v351 = vsel %vm329, %v320, 0.0
          %v352 = vsel %vm329, %v321, 0.0
          %v353 = vadd.f32 %v351, %v352
          %v354 = vsel %vm329, %v322, 0.0
          %v355 = vadd.f32 %v353, %v354
          %v356 = vsel %vm329, %v323, 0.0
          %v357 = vadd.f32 %v355, %v356
          %v358 = vsel %vm329, %v324, 0.0
          %v359 = vadd.f32 %v357, %v358
          %v360 = vsel %vm329, %v325, 0.0
          %v361 = vadd.f32 %v359, %v360
          %v362 = vsel %vm329, %v326, 0.0
          %v363 = vadd.f32 %v361, %v362
          %v364 = vsel %vm329, %v327, 0.0
          %v365 = vadd.f32 %v363, %v364
          %366 = vadd.xlane.f32.xlu0 %v365
          %v367 = vpop.xlane.xlu0 %366
          %v368 = vadd.f32 %v350, %v367
          %369 = vst.msk [vmem:[#allocation4] sm:$0xf] %vm348, %v368
          %v370 = vld [vmem:[#allocation3] sm:$0xf]
          %v371 = vmul.f32 %v312, %v312
          %v372 = vmul.f32 %v313, %v313
          %v373 = vmul.f32 %v314, %v314
          %v374 = vmul.f32 %v315, %v315
          %v375 = vmul.f32 %v316, %v316
          %v376 = vmul.f32 %v317, %v317
          %v377 = vmul.f32 %v318, %v318
          %v378 = vmul.f32 %v319, %v319
          %v379 = vsel %vm329, %v371, 0.0
          %v380 = vsel %vm329, %v372, 0.0
          %v381 = vadd.f32 %v379, %v380
          %v382 = vsel %vm329, %v373, 0.0
          %v383 = vadd.f32 %v381, %v382
          %v384 = vsel %vm329, %v374, 0.0
          %v385 = vadd.f32 %v383, %v384
          %v386 = vsel %vm329, %v375, 0.0
          %v387 = vadd.f32 %v385, %v386
          %v388 = vsel %vm329, %v376, 0.0
          %v389 = vadd.f32 %v387, %v388
          %v390 = vsel %vm329, %v377, 0.0
          %v391 = vadd.f32 %v389, %v390
          %v392 = vsel %vm329, %v378, 0.0
          %v393 = vadd.f32 %v391, %v392
          %394 = vadd.xlane.f32.xlu0 %v393
          %v395 = vpop.xlane.xlu0 %394
          %v396 = vadd.f32 %v370, %v395
          %397 = vst.msk [vmem:[#allocation3] sm:$0xf] %vm348, %v396
          %v398 = vld [vmem:[#allocation5] sm:$0xf]
          %v399 = vmul.f32 %v320, %v320
          %v400 = vmul.f32 %v321, %v321
          %v401 = vmul.f32 %v322, %v322
          %v402 = vmul.f32 %v323, %v323
          %v403 = vmul.f32 %v324, %v324
          %v404 = vmul.f32 %v325, %v325
          %v405 = vmul.f32 %v326, %v326
          %v406 = vmul.f32 %v327, %v327
          %v407 = vsel %vm329, %v399, 0.0
          %v408 = vsel %vm329, %v400, 0.0
          %v409 = vadd.f32 %v407, %v408
          %v410 = vsel %vm329, %v401, 0.0
          %v411 = vadd.f32 %v409, %v410
          %v412 = vsel %vm329, %v402, 0.0
          %v413 = vadd.f32 %v411, %v412
          %v414 = vsel %vm329, %v403, 0.0
          %v415 = vadd.f32 %v413, %v414
          %v416 = vsel %vm329, %v404, 0.0
          %v417 = vadd.f32 %v415, %v416
          %v418 = vsel %vm329, %v405, 0.0
          %v419 = vadd.f32 %v417, %v418
          %v420 = vsel %vm329, %v406, 0.0
          %v421 = vadd.f32 %v419, %v420
          %422 = vadd.xlane.f32.xlu0 %v421
          %v423 = vpop.xlane.xlu0 %422
          %v424 = vadd.f32 %v398, %v423
          %425 = vst.msk [vmem:[#allocation5] sm:$0xf] %vm348, %v424
        $region44: #{tpu_custom_call.1} parent=27 // pred_fallthru
          _
        %p426 = scmp.eq.s32.totalorder %s25, 1
        // Predicated region
        $region45: #{tpu_custom_call.1} parent=27 // pred_check
          %p427 = pneg %p426
        $region46: #{tpu_custom_call.1} parent=27 // pred_check_branch
          %429 = sbr.rel (%p427) target = $region48
        $region47: #{tpu_custom_call.1} parent=27 // pred_region
          %v430 = vld [vmem:[#allocation9] sm:$0xf]
          %v431 = vld [vmem:[#allocation2] sm:$0xf]
          %v432 = vmul.f32 %v431, 0.001953125
          %v433 = vld [vmem:[#allocation4] sm:$0xf]
          %v434 = vmul.f32 %v433, 0.001953125
          %v435 = vld [vmem:[#allocation3] sm:$0xf]
          %v436 = vmul.f32 %v435, 0.001953125
          %v437 = vmul.f32 %v432, %v432
          %v438 = vsub.f32 %v436, %v437
          %v439 = vmax.f32 %v438, 0.0
          %v440 = vld [vmem:[#allocation5] sm:$0xf]
          %v441 = vmul.f32 %v440, 0.001953125
          %v442 = vmul.f32 %v434, %v434
          %v443 = vsub.f32 %v441, %v442
          %v444 = vmax.f32 %v443, 0.0
          %v445 = vadd.f32 %v439, 1e-05
          %v446 = vrsqrt.pop %v445
          %v447 = vmul.f32 %v446, %v430
          %v448 = vadd.f32 %v444, 1e-05
          %v449 = vrsqrt.pop %v448
          %451 = vrot.lane.b32.xlu0 %v430, 126
          %v452 = vpop.permute.xlu0 %451
          %v454 = vmul.f32 %v449, %v452
          %v455 = vmul.f32 %v432, %v447
          %457 = vrot.lane.b32.xlu0 %v455, 1
          %v458 = vpop.permute.xlu0 %457
          %v460 = vsub.f32 %v430, %v458
          %v461 = vmul.f32 %v434, %v454
          %463 = vrot.lane.b32.xlu0 %v461, 3
          %v464 = vpop.permute.xlu0 %463
          %v466 = vsub.f32 %v430, %v464
          %v467 = vsel %vm267, 1, 0
          %v468 = vsel %vm268, 1, 0
          %v469 = vsel %vm269, 1, 0
          %v470 = vsel %vm270, 1, 0
          %vm471 = vcmp.eq.s32.totalorder %v467, 1
          %vm472 = vcmp.eq.s32.totalorder %v468, 1
          %vm473 = vcmp.eq.s32.totalorder %v469, 1
          %vm474 = vcmp.eq.s32.totalorder %v470, 1
          %476 = vset.pattern.permute.xlu0 0
          %477 = vperm.xlu0 %476, %v447
          %v478 = vpop.permute.xlu0 %477
          %481 = vset.pattern.permute.xlu0 0
          %482 = vperm.xlu0 %481, %v454
          %v483 = vpop.permute.xlu0 %482
          %v485 = vsel %vm471, %v478, %v483
          %v486 = vsel %vm472, %v478, %v483
          %v487 = vsel %vm473, %v478, %v483
          %v488 = vsel %vm474, %v478, %v483
          %490 = vset.pattern.permute.xlu0 1
          %491 = vperm.xlu0 %490, %v460
          %v492 = vpop.permute.xlu0 %491
          %495 = vset.pattern.permute.xlu0 3
          %496 = vperm.xlu0 %495, %v466
          %v497 = vpop.permute.xlu0 %496
          %v499 = vsel %vm471, %v492, %v497
          %v500 = vsel %vm472, %v492, %v497
          %v501 = vsel %vm473, %v492, %v497
          %v502 = vsel %vm474, %v492, %v497
          %v503 = vld [vmem:[#allocation6] sm:$0xff]
          %v504 = vld [vmem:[#allocation6 + $0x8] sm:$0xff]
          %v505 = vld [vmem:[#allocation6 + $0x10] sm:$0xff]
          %v506 = vld [vmem:[#allocation6 + $0x18] sm:$0xff]
          %v511 = vcombine.low %v485, %v486
          %v512 = vcombine.low %v487, %v488
          %v515 = vmul.f32 %v503, %v511
          %v516 = vmul.f32 %v504, %v512
          %v517 = vmul.f32 %v505, %v511
          %v518 = vmul.f32 %v506, %v512
          %v523 = vcombine.low %v499, %v500
          %v524 = vcombine.low %v501, %v502
          %v527 = vadd.f32 %v515, %v523
          %v528 = vadd.f32 %v516, %v524
          %v529 = vadd.f32 %v517, %v523
          %v530 = vadd.f32 %v518, %v524
          %531 = vst [vmem:[%s207] sm:$0xff] %v527
          %532 = vst [vmem:[%s207 + $0x8] sm:$0xff] %v528
          %533 = vst [vmem:[%s207 + $0x10] sm:$0xff] %v529
          %534 = vst [vmem:[%s207 + $0x18] sm:$0xff] %v530
        $region48: #{tpu_custom_call.1} parent=27 // pred_fallthru
          _
        %s535 = sand.u32 %s116, 1
        %s536 = scalar_lea.sflag [#allocation8], %s535
        %s537 = sand.u32 %s116, 1
        %s538 = smul.addr %s537, 32
        %s539 = scalar_lea.vmem [#allocation11], %s538
        // Predicated region
        $region49: #{tpu_custom_call.1} parent=27 // pred_check
          %p540 = pneg %p126
        $region50: #{tpu_custom_call.1} parent=27 // pred_check_branch
          %542 = sbr.rel (%p540) target = $region52
        $region51: #{tpu_custom_call.1} parent=27 // pred_region
          %s543 = smul.u32 %s26, %s25
          %s544 = smul.u32 %s27, %s25
          %s545 = smul.u32 2, %s543
          %s546 = smul.u32 4, %s544
          %s548 = ssub.s32 512, 512
          %549 = vsyncadd %s536, %s548
          %s550 = smul.addr %s24, 4
          %s551 = sadd.s32 %s546, %s550
          %s552 = smul.addr %s545, 4
          %s553 = sadd.s32 %s551, %s552
          %s554 = smul.addr %s553, 64
          %s555 = scalar_lea.hbm %s2, %s554
          %s556 = sshll.u32 %s539, 4
          %s557 = int_to_ptr.vmem [resolvable:$true] %s556
          %562 = dma.vmem_to_hbm [thread:$0]  %s557, 512, %s555, %s536, 256, 256, 16
        $region52: #{tpu_custom_call.1} parent=27 // pred_fallthru
          _
      $region28: #{tpu_custom_call.1} parent=5 // pred_fallthru
        _
      %p563 = scmp.le.s32.totalorder 2, %s13
      // Predicated region
      $region53: #{tpu_custom_call.1} parent=5 // pred_check
        %p564 = pneg %p563
      $region54: #{tpu_custom_call.1} parent=5 // pred_check_branch
        %566 = sbr.rel (%p564) target = $region56
      $region55: #{tpu_custom_call.1} parent=5 // pred_region
        %s567 = ssub.s32 %s13, 2
        // Predicated region
        $region57: #{tpu_custom_call.1} parent=55 // pred_check
          %p568 = pneg %p132
        $region58: #{tpu_custom_call.1} parent=55 // pred_check_branch
          %570 = sbr.rel (%p568) target = $region60
        $region59: #{tpu_custom_call.1} parent=55 // pred_region
          %s571 = sand.u32 %s117, 1
          %s572 = scalar_lea.sflag [#allocation8], %s571
          %s573 = sand.u32 %s117, 1
          %s574 = smul.addr %s573, 32
          %s575 = scalar_lea.vmem [#allocation11], %s574
          %576 = dma.done %s572, 512
        $region60: #{tpu_custom_call.1} parent=55 // pred_fallthru
          _
      $region56: #{tpu_custom_call.1} parent=5 // pred_fallthru
        _
    $region6: #{tpu_custom_call.1} parent=1 // loop_footer
      %s17 = sadd.s32 1, %s13
    $region7: #{tpu_custom_call.1} parent=1 // loop_footer_branch
      %12 = sbr.rel target = $region3
    $region8: #{tpu_custom_call.1} parent=1 // loop_exit
      _
    %577 = vsyncpa [#allocation7], 1
    %s578 = scalar_lea.sflag [#allocation7], 1
    %579 = vsyncpa %s578, 1
    %580 = vsyncpa [#allocation10], 1
    %581 = vsyncpa [#allocation8], 1
    %s582 = scalar_lea.sflag [#allocation8], 1
    %583 = vsyncpa %s582, 1

</llo_original>
